<compile_context>
chip_gen: v7x
topology: tpu7x:2x2x1
jax: 0.10.0
libtpu: 0.0.40
codegen_flags: <defaults>
</compile_context>

<pallas_src>
import math
from functools import partial

import jax
import jax.numpy as jnp
from jax import lax
from jax.experimental import pallas as pl
from jax.experimental.pallas import tpu as pltpu


def _round_up(x, m):
    return ((x + m - 1) // m) * m


def _ff_unn_kernel(x_ref, w1_ref, b1_ref, w2_ref, b2_ref, out_ref, *, n_classes):
    # x:   (tb, n1)   f32   batch tile (pipelined over grid); cast to bf16 before MXU
    # w1:  (n1, n2)   f32   resident; cast to bf16 in-kernel
    # b1:  (2, n2)    f32   row 0 = b1 + b1_stoch (energy term), row 1 = H1 pre-act bias
    # w2:  (n2, n3p)  f32   resident (zero-padded classes)
    # b2:  (1, n3p)   f32   b2 + b2_stoch (zero-padded classes)
    # out: (tb, n3p)  f32   lanes [0, n3): Y_logits; lane n3: energy; lane n3+1: negsh
    X = x_ref[...].astype(jnp.bfloat16)
    W1 = w1_ref[...].astype(jnp.bfloat16)
    b1p = b1_ref[...]
    W2 = w2_ref[...]
    b2c = b2_ref[...]

    b1e = b1p[0:1, :]          # bias used in the energy term (pure b1 + b1_stochastic)
    b1h = b1p[1:2, :]          # pre-activation bias (includes folded Y0 @ W2^T term)

    # ----- H1 = relu(X @ W1 + bias) -----
    xw1 = jnp.dot(X, W1, preferred_element_type=jnp.float32)          # (tb, n2) f32
    H1 = jnp.maximum(xw1 + b1h, 0.0)
    # TODO(synk): 'tanh' activation (with reg_tanh energy) and dropout_p > 0 mask paths
    #             are not implemented (module defaults: activation='relu', p=0).

    # ----- Y_logits = H1 @ W2 + bias (classes padded to a full 128-lane vreg) -----
    h1w2 = jnp.dot(H1, W2, preferred_element_type=jnp.float32)        # (tb, n3p)
    logits = h1w2 + b2c

    # ----- masked softmax over the n_classes valid lanes (exact reciprocal) -----
    col = lax.broadcasted_iota(jnp.int32, logits.shape, 1)
    valid = col < n_classes
    masked = jnp.where(valid, logits, jnp.float32(-1e30))
    m = jnp.max(masked, axis=-1, keepdims=True)
    e = jnp.where(valid, jnp.exp(masked - m), 0.0)
    Y = e / jnp.sum(e, axis=-1, keepdims=True)                         # padded lanes == 0

    # reg_softmax(Y): replace exact zeros by 1 (log(1)=0); padded lanes drop out.
    safe_y = jnp.where(Y == 0.0, 1.0, Y)
    negsh = jnp.sum(safe_y * jnp.log(safe_y), axis=-1, keepdims=True)  # (tb, 1)

    # ----- fused per-row energies -----
    energy_y = negsh - jnp.sum(Y * (h1w2 + b2c), axis=-1, keepdims=True)
    energy_h1 = jnp.sum(H1 * (0.5 * H1 - xw1 - b1e), axis=-1, keepdims=True)
    energy = energy_y + energy_h1

    # ----- single lane-dense store: logits | energy | negsh packed by lane index -----
    packed = jnp.where(valid, logits, 0.0)
    packed = jnp.where(col == n_classes, energy, packed)
    packed = jnp.where(col == n_classes + 1, negsh, packed)
    out_ref[...] = packed


def ff_unn_forward(X, b1_stochastic, b2_stochastic, W1, b1, W2, b2,
                   y_init="zero", block_b=512):
    """Pallas implementation of FF_UNN.forward (activation='relu', dropout p=0, k=1 step).

    block_b: batch tile (the tuning knob). 512-1024 is the sweet spot for the
    HBM/step-overhead-bound regime; even tb=2048 is ~12 MB of VMEM working set,
    well within v7x's 32 MiB scoped default, so never down-tile for v7x.
    """
    b = X.shape[0]
    n1, n2 = W1.shape
    n3 = W2.shape[1]

    # Lane-dense output: n_classes + 2 packed scalars (energy, negsh), rounded to 128.
    n3p = max(_round_up(n3 + 2, 128), 128)

    f32 = jnp.float32
    X_flat = X.reshape(b, n1).astype(f32)                  # torch.flatten(X, 1, 3)

    b1c = (b1 + b1_stochastic).reshape(1, n2).astype(f32)  # fold stochastic biases
    b2c = (b2 + b2_stochastic).reshape(1, n3).astype(f32)

    # Y0 @ W2^T is a constant (1, n2) row for any fixed y_init -> fold into the bias.
    if y_init == "zero":
        h1_bias = b1c                                      # Y0 == 0
    elif y_init == "uniform":
        Y0 = jax.nn.softmax(jnp.zeros((1, n3), f32), axis=-1)
        h1_bias = b1c + jnp.dot(Y0, W2.astype(f32).T)
    else:
        # TODO(synk): 'rand' y_init needs a host RNG stream matching torch.rand.
        raise NotImplementedError(y_init)
    b1_pack = jnp.concatenate([b1c, h1_bias], axis=0)      # (2, n2)

    # ----- batch tiling: weights resident, X / packed output pipelined over batch -----
    tb = min(block_b, _round_up(b, 8))
    if tb >= 16 and _round_up(b, tb) == tb:
        # Would be a single grid step: split so v7x's two TensorCores both get tiles.
        tb = max(8, _round_up(pl.cdiv(b, 2), 8))
    bp = _round_up(b, tb)
    grid = (bp // tb,)

    Xp = X_flat if bp == b else jnp.pad(X_flat, ((0, bp - b), (0, 0)))
    W1f = W1.astype(f32)
    W2p = jnp.pad(W2.astype(f32), ((0, 0), (0, n3p - n3)))
    b2p = jnp.pad(b2c, ((0, 0), (0, n3p - n3)))

    kernel = partial(_ff_unn_kernel, n_classes=n3)

    cost = pl.CostEstimate(
        flops=2 * bp * n1 * n2 + 2 * bp * n2 * n3p,
        transcendentals=2 * bp * n3p,
        bytes_accessed=(Xp.size * 4 + W1f.size * 4 + W2p.size * 4
                        + b1_pack.size * 4 + b2p.size * 4 + bp * n3p * 4),
    )

    packed = pl.pallas_call(
        kernel,
        grid=grid,
        in_specs=[
            pl.BlockSpec((tb, n1), lambda i: (i, 0)),     # X tile (f32, double-buffered)
            pl.BlockSpec((n1, n2), lambda i: (0, 0)),     # W1 resident (cast in-kernel)
            pl.BlockSpec((2, n2), lambda i: (0, 0)),      # packed biases
            pl.BlockSpec((n2, n3p), lambda i: (0, 0)),    # W2 resident
            pl.BlockSpec((1, n3p), lambda i: (0, 0)),     # b2 + b2_stochastic
        ],
        out_specs=pl.BlockSpec((tb, n3p), lambda i: (i, 0)),   # logits|energy|negsh
        out_shape=jax.ShapeDtypeStruct((bp, n3p), f32),
        compiler_params=pltpu.CompilerParams(
            dimension_semantics=("parallel",)),           # v7x: both TCs take batch tiles
        cost_estimate=cost,
    )(Xp, W1f, b1_pack, W2p, b2p)

    Y_logits = packed[:b, :n3]
    energy = packed[:b, n3]
    negsh = packed[:b, n3 + 1]
    total_energy = [energy]                               # list of one (b,) tensor
    total_entropy = [-jnp.sum(negsh)]                     # list of one scalar
    return Y_logits, total_energy, total_entropy


def _ff_unn_reference(X, b1s, b2s, W1, b1, W2, b2):
    """Pure-JAX reference (y_init='zero', relu, p=0), matching the kernel's bf16
    MXU inputs for the first matmul (f32 accumulation)."""
    b = X.shape[0]
    Xf = X.reshape(b, -1).astype(jnp.float32)
    Xr = Xf.astype(jnp.bfloat16)
    W1r = W1.astype(jnp.bfloat16)
    b1c = (b1 + b1s).astype(jnp.float32)
    b2c = (b2 + b2s).astype(jnp.float32)
    xw1 = jnp.dot(Xr, W1r, preferred_element_type=jnp.float32)
    H1 = jnp.maximum(xw1 + b1c, 0.0)
    h1w2 = H1 @ W2.astype(jnp.float32)
    Yl = h1w2 + b2c
    Y = jax.nn.softmax(Yl, axis=-1)
    safe = jnp.where(Y == 0.0, 1.0, Y)
    negsh = jnp.sum(safe * jnp.log(safe), axis=1)
    ey = -(Y @ b2c) + negsh - jnp.sum(Y * h1w2, axis=1)
    eh = -(H1 @ b1c) + 0.5 * jnp.sum(H1 * H1, axis=1) - jnp.sum(H1 * xw1, axis=1)
    return Yl, ey + eh, -jnp.sum(negsh)


if __name__ == "__main__":
    # Module-implied sizes: d0=28 -> n1=784, n2=128, n3=n_classes (=10). Small batch.
    b, d0 = 8, 28
    n1, n2, n3 = 784, 128, 10

    key = jax.random.PRNGKey(0)
    k = jax.random.split(key, 7)

    # Deterministic init mirroring kaiming_uniform_(a=sqrt(5)) + uniform bias bounds.
    bound_w1 = 1.0 / math.sqrt(n2)   # fan_in(W1) = 128
    bound_w2 = 1.0 / math.sqrt(n3)   # fan_in(W2) = n_classes
    W1 = jax.random.uniform(k[0], (n1, n2), jnp.float32, -bound_w1, bound_w1)
    b1 = jax.random.uniform(k[1], (n2,), jnp.float32, -bound_w1, bound_w1)
    W2 = jax.random.uniform(k[2], (n2, n3), jnp.float32, -bound_w2, bound_w2)
    b2 = jax.random.uniform(k[3], (n3,), jnp.float32, -bound_w2, bound_w2)

    X = jax.random.uniform(k[4], (b, 1, d0, d0), jnp.float32)      # NCHW like PyTorch
    b1_stochastic = 0.01 * jax.random.normal(k[5], (n2,), jnp.float32)
    b2_stochastic = 0.01 * jax.random.normal(k[6], (n3,), jnp.float32)

    Y_logits, total_energy, total_entropy = ff_unn_forward(
        X, b1_stochastic, b2_stochastic, W1, b1, W2, b2, y_init="zero")
    jax.block_until_ready((Y_logits, total_energy[0], total_entropy[0]))

    # Sanity check against pure-JAX reference.
    Yl_ref, en_ref, ent_ref = _ff_unn_reference(
        X, b1_stochastic, b2_stochastic, W1, b1, W2, b2)
    assert jnp.allclose(Y_logits, Yl_ref, rtol=1e-2, atol=1e-2)
    assert jnp.allclose(total_energy[0], en_ref, rtol=1e-2, atol=2e-1)
    assert jnp.allclose(total_entropy[0], ent_ref, rtol=1e-2, atol=1e-2)

    print("KERNEL_OK")
</pallas_src>

<mosaic_0001>
module attributes {stable_mosaic.version = 11 : i64} {
  func.func @_ff_unn_kernel(%arg0: i32, %arg1: memref<8x784xf32, #tpu.memory_space<vmem>>, %arg2: memref<784x128xf32, #tpu.memory_space<vmem>>, %arg3: memref<2x128xf32, #tpu.memory_space<vmem>>, %arg4: memref<128x128xf32, #tpu.memory_space<vmem>>, %arg5: memref<1x128xf32, #tpu.memory_space<vmem>>, %arg6: memref<8x128xf32, #tpu.memory_space<vmem>>) attributes {dimension_semantics = [#tpu.dimension_semantics<parallel>], iteration_bounds = array<i64: 1>, scalar_prefetch = 0 : i64, scratch_operands = 0 : i64, tpu.core_type = #tpu.core_type<tc>, window_params = [{transform_indices = @transform_0, window_bounds = array<i64: 8, 784>}, {pipeline_mode = #tpu.pipeline_mode<synchronous>, transform_indices = @transform_1, window_bounds = array<i64: 784, 128>}, {pipeline_mode = #tpu.pipeline_mode<synchronous>, transform_indices = @transform_2, window_bounds = array<i64: 2, 128>}, {pipeline_mode = #tpu.pipeline_mode<synchronous>, transform_indices = @transform_3, window_bounds = array<i64: 128, 128>}, {pipeline_mode = #tpu.pipeline_mode<synchronous>, transform_indices = @transform_4, window_bounds = array<i64: 1, 128>}, {transform_indices = @transform_5, window_bounds = array<i64: 8, 128>}]} {
    %c0 = arith.constant 0 : index
    %c0_0 = arith.constant 0 : index
    %0 = vector.load %arg1[%c0, %c0_0] : memref<8x784xf32, #tpu.memory_space<vmem>>, vector<8x784xf32>
    %1 = arith.truncf %0 : vector<8x784xf32> to vector<8x784xbf16>
    %c0_1 = arith.constant 0 : index
    %c0_2 = arith.constant 0 : index
    %2 = vector.load %arg2[%c0_1, %c0_2] : memref<784x128xf32, #tpu.memory_space<vmem>>, vector<784x128xf32>
    %3 = arith.truncf %2 : vector<784x128xf32> to vector<784x128xbf16>
    %c0_3 = arith.constant 0 : index
    %c0_4 = arith.constant 0 : index
    %4 = vector.load %arg3[%c0_3, %c0_4] : memref<2x128xf32, #tpu.memory_space<vmem>>, vector<2x128xf32>
    %c0_5 = arith.constant 0 : index
    %c0_6 = arith.constant 0 : index
    %5 = vector.load %arg4[%c0_5, %c0_6] : memref<128x128xf32, #tpu.memory_space<vmem>>, vector<128x128xf32>
    %c0_7 = arith.constant 0 : index
    %c0_8 = arith.constant 0 : index
    %6 = vector.load %arg5[%c0_7, %c0_8] : memref<1x128xf32, #tpu.memory_space<vmem>>, vector<1x128xf32>
    %7 = vector.extract_strided_slice %4 {offsets = [0, 0], sizes = [1, 128], strides = [1, 1]} : vector<2x128xf32> to vector<1x128xf32>
    %8 = vector.extract_strided_slice %4 {offsets = [1, 0], sizes = [1, 128], strides = [1, 1]} : vector<2x128xf32> to vector<1x128xf32>
    %cst = arith.constant dense<0.000000e+00> : vector<8x128xf32>
    %9 = tpu.matmul %1, %3, %cst {dimension_numbers = #tpu.dot_dimension_numbers<[1], [0], [0], [1], [0, 0, 1, 1], [], []>} : vector<8x784xbf16>, vector<784x128xbf16>, vector<8x128xf32> -> vector<8x128xf32>
    %10 = vector.broadcast %8 : vector<1x128xf32> to vector<8x128xf32>
    %11 = arith.addf %9, %10 : vector<8x128xf32>
    %cst_9 = arith.constant 0.000000e+00 : f32
    %12 = vector.broadcast %cst_9 : f32 to vector<8x128xf32>
    %13 = arith.maximumf %11, %12 : vector<8x128xf32>
    %cst_10 = arith.constant dense<0.000000e+00> : vector<8x128xf32>
    %14 = tpu.matmul %13, %5, %cst_10 {dimension_numbers = #tpu.dot_dimension_numbers<[1], [0], [0], [1], [0, 0, 1, 1], [], []>} : vector<8x128xf32>, vector<128x128xf32>, vector<8x128xf32> -> vector<8x128xf32>
    %15 = vector.broadcast %6 : vector<1x128xf32> to vector<8x128xf32>
    %16 = arith.addf %14, %15 : vector<8x128xf32>
    %17 = tpu.iota {dimensions = array<i32: 1>} : vector<8x128xi32>
    %c10_i32 = arith.constant 10 : i32
    %18 = vector.broadcast %c10_i32 : i32 to vector<8x128xi32>
    %19 = arith.cmpi slt, %17, %18 : vector<8x128xi32>
    %cst_11 = arith.constant -1.000000e+30 : f32
    %20 = vector.broadcast %cst_11 : f32 to vector<8x128xf32>
    %21 = arith.select %19, %16, %20 : vector<8x128xi1>, vector<8x128xf32>
    %cst_12 = arith.constant dense<0xFF800000> : vector<8xf32>
    %22 = vector.multi_reduction <maximumf>, %21, %cst_12 [1] : vector<8x128xf32> to vector<8xf32>
    %23 = vector.shape_cast %22 : vector<8xf32> to vector<8x1xf32>
    %24 = vector.broadcast %23 : vector<8x1xf32> to vector<8x128xf32>
    %25 = arith.subf %21, %24 : vector<8x128xf32>
    %26 = math.exp %25 : vector<8x128xf32>
    %cst_13 = arith.constant 0.000000e+00 : f32
    %27 = vector.broadcast %cst_13 : f32 to vector<8x128xf32>
    %28 = arith.select %19, %26, %27 : vector<8x128xi1>, vector<8x128xf32>
    %cst_14 = arith.constant dense<0.000000e+00> : vector<8xf32>
    %29 = vector.multi_reduction <add>, %28, %cst_14 [1] : vector<8x128xf32> to vector<8xf32>
    %30 = vector.shape_cast %29 : vector<8xf32> to vector<8x1xf32>
    %31 = vector.broadcast %30 : vector<8x1xf32> to vector<8x128xf32>
    %32 = arith.divf %28, %31 : vector<8x128xf32>
    %cst_15 = arith.constant 0.000000e+00 : f32
    %33 = vector.broadcast %cst_15 : f32 to vector<8x128xf32>
    %34 = arith.cmpf oeq, %32, %33 : vector<8x128xf32>
    %cst_16 = arith.constant 1.000000e+00 : f32
    %35 = vector.broadcast %cst_16 : f32 to vector<8x128xf32>
    %36 = arith.select %34, %35, %32 : vector<8x128xi1>, vector<8x128xf32>
    %37 = math.log %36 : vector<8x128xf32>
    %38 = arith.mulf %36, %37 : vector<8x128xf32>
    %cst_17 = arith.constant dense<0.000000e+00> : vector<8xf32>
    %39 = vector.multi_reduction <add>, %38, %cst_17 [1] : vector<8x128xf32> to vector<8xf32>
    %40 = vector.shape_cast %39 : vector<8xf32> to vector<8x1xf32>
    %41 = vector.broadcast %6 : vector<1x128xf32> to vector<8x128xf32>
    %42 = arith.addf %14, %41 : vector<8x128xf32>
    %43 = arith.mulf %32, %42 : vector<8x128xf32>
    %cst_18 = arith.constant dense<0.000000e+00> : vector<8xf32>
    %44 = vector.multi_reduction <add>, %43, %cst_18 [1] : vector<8x128xf32> to vector<8xf32>
    %45 = vector.shape_cast %44 : vector<8xf32> to vector<8x1xf32>
    %46 = arith.subf %40, %45 : vector<8x1xf32>
    %cst_19 = arith.constant 5.000000e-01 : f32
    %47 = vector.broadcast %cst_19 : f32 to vector<8x128xf32>
    %48 = arith.mulf %47, %13 : vector<8x128xf32>
    %49 = arith.subf %48, %9 : vector<8x128xf32>
    %50 = vector.broadcast %7 : vector<1x128xf32> to vector<8x128xf32>
    %51 = arith.subf %49, %50 : vector<8x128xf32>
    %52 = arith.mulf %13, %51 : vector<8x128xf32>
    %cst_20 = arith.constant dense<0.000000e+00> : vector<8xf32>
    %53 = vector.multi_reduction <add>, %52, %cst_20 [1] : vector<8x128xf32> to vector<8xf32>
    %54 = vector.shape_cast %53 : vector<8xf32> to vector<8x1xf32>
    %55 = arith.addf %46, %54 : vector<8x1xf32>
    %cst_21 = arith.constant 0.000000e+00 : f32
    %56 = vector.broadcast %cst_21 : f32 to vector<8x128xf32>
    %57 = arith.select %19, %16, %56 : vector<8x128xi1>, vector<8x128xf32>
    %c10_i32_22 = arith.constant 10 : i32
    %58 = vector.broadcast %c10_i32_22 : i32 to vector<8x128xi32>
    %59 = arith.cmpi eq, %17, %58 : vector<8x128xi32>
    %60 = vector.shape_cast %55 : vector<8x1xf32> to vector<8x1xf32>
    %61 = vector.broadcast %60 : vector<8x1xf32> to vector<8x128xf32>
    %62 = arith.select %59, %61, %57 : vector<8x128xi1>, vector<8x128xf32>
    %c11_i32 = arith.constant 11 : i32
    %63 = vector.broadcast %c11_i32 : i32 to vector<8x128xi32>
    %64 = arith.cmpi eq, %17, %63 : vector<8x128xi32>
    %65 = vector.shape_cast %40 : vector<8x1xf32> to vector<8x1xf32>
    %66 = vector.broadcast %65 : vector<8x1xf32> to vector<8x128xf32>
    %67 = arith.select %64, %66, %62 : vector<8x128xi1>, vector<8x128xf32>
    %c0_23 = arith.constant 0 : index
    %c0_24 = arith.constant 0 : index
    %68 = vector.load %arg6[%c0_23, %c0_24] : memref<8x128xf32, #tpu.memory_space<vmem>>, vector<8x128xf32>
    tpu.vector_store %arg6[%c0_23, %c0_24], %67 {strides = array<i32>} : memref<8x128xf32, #tpu.memory_space<vmem>>, vector<8x128xf32>,
    return
  }
  func.func @transform_0(%arg0: i32) -> (i32, i32) {
    %c0_i32 = arith.constant 0 : i32
    %c0_i32_0 = arith.constant 0 : i32
    return %arg0, %c0_i32 : i32, i32
  }
  func.func @transform_1(%arg0: i32) -> (i32, i32) {
    %c0_i32 = arith.constant 0 : i32
    %c0_i32_0 = arith.constant 0 : i32
    %c0_i32_1 = arith.constant 0 : i32
    return %c0_i32, %c0_i32_0 : i32, i32
  }
  func.func @transform_2(%arg0: i32) -> (i32, i32) {
    %c0_i32 = arith.constant 0 : i32
    %c0_i32_0 = arith.constant 0 : i32
    %c0_i32_1 = arith.constant 0 : i32
    return %c0_i32, %c0_i32_0 : i32, i32
  }
  func.func @transform_3(%arg0: i32) -> (i32, i32) {
    %c0_i32 = arith.constant 0 : i32
    %c0_i32_0 = arith.constant 0 : i32
    %c0_i32_1 = arith.constant 0 : i32
    return %c0_i32, %c0_i32_0 : i32, i32
  }
  func.func @transform_4(%arg0: i32) -> (i32, i32) {
    %c0_i32 = arith.constant 0 : i32
    %c0_i32_0 = arith.constant 0 : i32
    %c0_i32_1 = arith.constant 0 : i32
    return %c0_i32, %c0_i32_0 : i32, i32
  }
  func.func @transform_5(%arg0: i32) -> (i32, i32) {
    %c0_i32 = arith.constant 0 : i32
    %c0_i32_0 = arith.constant 0 : i32
    return %arg0, %c0_i32 : i32, i32
  }
}

</mosaic_0001>

<llo_original>
// kernel: tpu_custom_call.1
$region0: #{tpu_custom_call.1}
  #allocation0 [shape = 'u32[]', space=smem, size = 0x4, offset = 0x4, fixed_abs, tag = 'smem constant byte address 0x4 - core index']
  #allocation1 [shape = 'u32[144,128]{1,0:T(1,128)}', space=vmem, size = 0x12000, scoped, tag = 'internal scratch']
  %s0 = inlined_call_operand.hbm [shape: f32[8,784], index: 0, kind: input, shape index: {}]
  %s1 = inlined_call_operand.hbm [shape: f32[784,128], index: 1, kind: input, shape index: {}]
  %s2 = inlined_call_operand.vmem [shape: f32[2,128], index: 2, kind: input, shape index: {}]
  %s3 = inlined_call_operand.hbm [shape: f32[128,128], index: 3, kind: input, shape index: {}]
  %s4 = inlined_call_operand.vmem [shape: f32[1,128], index: 4, kind: input, shape index: {}]
  %s5 = inlined_call_operand.hbm [shape: f32[8,128], index: 5, kind: output, shape index: {}]
  %s6 = sld [smem:[#allocation0]]
  $region42: #{tpu_custom_call.1} parent=0
    _
  %s8 = ssub.s32 1, %s6
  %s9 = scalar_select 0, %s8, %s6
  $region1: #{tpu_custom_call.1} parent=0
    #allocation2 [shape = 'u8[28672]{0}', space=vmem, size = 0x7000, scoped, tag = 'input window, operand 0, single buffered']
    #allocation3 [shape = 's32[1]{0}', space=sflag, size = 0x4, scoped, tag = 'scoped memory for tpu_custom_call.1']
    #allocation4 [shape = 's32[1]{0}', space=sflag, size = 0x4, scoped, tag = 'scoped memory for tpu_custom_call.1']
    #allocation5 [shape = 'u8[401408]{0}', space=vmem, size = 0x62000, scoped, tag = 'input window, operand 1, single buffered']
    #allocation6 [shape = 's32[1]{0}', space=sflag, size = 0x4, scoped, tag = 'scoped memory for tpu_custom_call.1']
    #allocation7 [shape = 'u8[65536]{0}', space=vmem, size = 0x10000, scoped, tag = 'input window, operand 3, single buffered']
    #allocation8 [shape = 'u8[4096]{0}', space=vmem, size = 0x1000, scoped, tag = 'output window, operand 0, single buffered']
    %10 = vsyncpa [#allocation3], 0
    %11 = vsyncpa [#allocation6], 0
    %12 = vsyncpa [#allocation4], 0
    // Predicated region
    $region2: #{tpu_custom_call.1} parent=1 // pred_check
      _
    $region3: #{tpu_custom_call.1} parent=1 // pred_check_branch
      %14 = sbr.rel (0) target = $region5
    $region4: #{tpu_custom_call.1} parent=1 // pred_region
      %s16 = ssub.s32 896, 896
      %17 = vsyncadd [#allocation3], %s16
      %s19 = sshll.u32 [#allocation2], 4
      %s20 = int_to_ptr.vmem [resolvable:$true] %s19
      %22 = dma.hbm_to_vmem [thread:$0]  %s0, 896, %s20, [#allocation3]
    $region5: #{tpu_custom_call.1} parent=1 // pred_fallthru
      _
    // Predicated region
    $region6: #{tpu_custom_call.1} parent=1 // pred_check
      _
    $region7: #{tpu_custom_call.1} parent=1 // pred_check_branch
      %24 = sbr.rel (0) target = $region9
    $region8: #{tpu_custom_call.1} parent=1 // pred_region
      %s26 = ssub.s32 12544, 12544
      %27 = vsyncadd [#allocation6], %s26
      %s28 = sshll.u32 [#allocation5], 4
      %s29 = int_to_ptr.vmem [resolvable:$true] %s28
      %34 = dma.hbm_to_vmem [thread:$0]  %s1, 12544, %s29, [#allocation6], 128, 128, 8
    $region9: #{tpu_custom_call.1} parent=1 // pred_fallthru
      _
    // Predicated region
    $region10: #{tpu_custom_call.1} parent=1 // pred_check
      _
    $region11: #{tpu_custom_call.1} parent=1 // pred_check_branch
      %36 = sbr.rel (0) target = $region13
    $region12: #{tpu_custom_call.1} parent=1 // pred_region
      _
    $region13: #{tpu_custom_call.1} parent=1 // pred_fallthru
      _
    // Predicated region
    $region14: #{tpu_custom_call.1} parent=1 // pred_check
      _
    $region15: #{tpu_custom_call.1} parent=1 // pred_check_branch
      %38 = sbr.rel (0) target = $region17
    $region16: #{tpu_custom_call.1} parent=1 // pred_region
      %s40 = ssub.s32 2048, 2048
      %41 = vsyncadd [#allocation6], %s40
      %s42 = sshll.u32 [#allocation7], 4
      %s43 = int_to_ptr.vmem [resolvable:$true] %s42
      %48 = dma.hbm_to_vmem [thread:$0]  %s3, 2048, %s43, [#allocation6], 128, 128, 8
    $region17: #{tpu_custom_call.1} parent=1 // pred_fallthru
      _
    // Predicated region
    $region18: #{tpu_custom_call.1} parent=1 // pred_check
      _
    $region19: #{tpu_custom_call.1} parent=1 // pred_check_branch
      %50 = sbr.rel (0) target = $region21
    $region20: #{tpu_custom_call.1} parent=1 // pred_region
      _
    $region21: #{tpu_custom_call.1} parent=1 // pred_fallthru
      _
    // Predicated region
    $region22: #{tpu_custom_call.1} parent=1 // pred_check
      _
    $region23: #{tpu_custom_call.1} parent=1 // pred_check_branch
      %52 = sbr.rel (0) target = $region25
    $region24: #{tpu_custom_call.1} parent=1 // pred_region
      %53 = dma.done [#allocation3], 896
    $region25: #{tpu_custom_call.1} parent=1 // pred_fallthru
      _
    // Predicated region
    $region26: #{tpu_custom_call.1} parent=1 // pred_check
      _
    $region27: #{tpu_custom_call.1} parent=1 // pred_check_branch
      %55 = sbr.rel (0) target = $region29
    $region28: #{tpu_custom_call.1} parent=1 // pred_region
      %56 = dma.done [#allocation6], 12544
    $region29: #{tpu_custom_call.1} parent=1 // pred_fallthru
      _
    // Predicated region
    $region30: #{tpu_custom_call.1} parent=1 // pred_check
      _
    $region31: #{tpu_custom_call.1} parent=1 // pred_check_branch
      %58 = sbr.rel (0) target = $region33
    $region32: #{tpu_custom_call.1} parent=1 // pred_region
      %59 = dma.done [#allocation6], 2048
    $region33: #{tpu_custom_call.1} parent=1 // pred_fallthru
      _
    %v61 = vld [vmem:[#allocation2] sm:$0xff]
    %v62 = vld [vmem:[#allocation2 + $0x8] sm:$0xff]
    %v63 = vld [vmem:[#allocation2 + $0x10] sm:$0xff]
    %v64 = vld [vmem:[#allocation2 + $0x18] sm:$0xff]
    %v65 = vld [vmem:[#allocation2 + $0x20] sm:$0xff]
    %v66 = vld [vmem:[#allocation2 + $0x28] sm:$0xff]
    %v67 = vld [vmem:[#allocation2 + $0x30] sm:$0xff]
    %v68 = vpack.c.bf16 %v61, %v61
    %v69 = vpack.c.bf16 %v62, %v62
    %v70 = vpack.c.bf16 %v63, %v63
    %v71 = vpack.c.bf16 %v64, %v64
    %v72 = vpack.c.bf16 %v65, %v65
    %v73 = vpack.c.bf16 %v66, %v66
    %v74 = vpack.c.bf16 %v67, %v67
    %v75 = vld [vmem:[#allocation5] sm:$0xff]
    %v76 = vld [vmem:[#allocation5 + $0x8] sm:$0xff]
    %v77 = vld [vmem:[#allocation5 + $0x10] sm:$0xff]
    %v78 = vld [vmem:[#allocation5 + $0x18] sm:$0xff]
    %v79 = vld [vmem:[#allocation5 + $0x20] sm:$0xff]
    %v80 = vld [vmem:[#allocation5 + $0x28] sm:$0xff]
    %v81 = vld [vmem:[#allocation5 + $0x30] sm:$0xff]
    %v82 = vld [vmem:[#allocation5 + $0x38] sm:$0xff]
    %v83 = vld [vmem:[#allocation5 + $0x40] sm:$0xff]
    %v84 = vld [vmem:[#allocation5 + $0x48] sm:$0xff]
    %v85 = vld [vmem:[#allocation5 + $0x50] sm:$0xff]
    %v86 = vld [vmem:[#allocation5 + $0x58] sm:$0xff]
    %v87 = vld [vmem:[#allocation5 + $0x60] sm:$0xff]
    %v88 = vld [vmem:[#allocation5 + $0x68] sm:$0xff]
    %v89 = vld [vmem:[#allocation5 + $0x70] sm:$0xff]
    %v90 = vld [vmem:[#allocation5 + $0x78] sm:$0xff]
    %v91 = vld [vmem:[#allocation5 + $0x80] sm:$0xff]
    %v92 = vld [vmem:[#allocation5 + $0x88] sm:$0xff]
    %v93 = vld [vmem:[#allocation5 + $0x90] sm:$0xff]
    %v94 = vld [vmem:[#allocation5 + $0x98] sm:$0xff]
    %v95 = vld [vmem:[#allocation5 + $0xa0] sm:$0xff]
    %v96 = vld [vmem:[#allocation5 + $0xa8] sm:$0xff]
    %v97 = vld [vmem:[#allocation5 + $0xb0] sm:$0xff]
    %v98 = vld [vmem:[#allocation5 + $0xb8] sm:$0xff]
    %v99 = vld [vmem:[#allocation5 + $0xc0] sm:$0xff]
    %v100 = vld [vmem:[#allocation5 + $0xc8] sm:$0xff]
    %v101 = vld [vmem:[#allocation5 + $0xd0] sm:$0xff]
    %v102 = vld [vmem:[#allocation5 + $0xd8] sm:$0xff]
    %v103 = vld [vmem:[#allocation5 + $0xe0] sm:$0xff]
    %v104 = vld [vmem:[#allocation5 + $0xe8] sm:$0xff]
    %v105 = vld [vmem:[#allocation5 + $0xf0] sm:$0xff]
    %v106 = vld [vmem:[#allocation5 + $0xf8] sm:$0xff]
    %v107 = vld [vmem:[#allocation5 + $0x100] sm:$0xff]
    %v108 = vld [vmem:[#allocation5 + $0x108] sm:$0xff]
    %v109 = vld [vmem:[#allocation5 + $0x110] sm:$0xff]
    %v110 = vld [vmem:[#allocation5 + $0x118] sm:$0xff]
    %v111 = vld [vmem:[#allocation5 + $0x120] sm:$0xff]
    %v112 = vld [vmem:[#allocation5 + $0x128] sm:$0xff]
    %v113 = vld [vmem:[#allocation5 + $0x130] sm:$0xff]
    %v114 = vld [vmem:[#allocation5 + $0x138] sm:$0xff]
    %v115 = vld [vmem:[#allocation5 + $0x140] sm:$0xff]
    %v116 = vld [vmem:[#allocation5 + $0x148] sm:$0xff]
    %v117 = vld [vmem:[#allocation5 + $0x150] sm:$0xff]
    %v118 = vld [vmem:[#allocation5 + $0x158] sm:$0xff]
    %v119 = vld [vmem:[#allocation5 + $0x160] sm:$0xff]
    %v120 = vld [vmem:[#allocation5 + $0x168] sm:$0xff]
    %v121 = vld [vmem:[#allocation5 + $0x170] sm:$0xff]
    %v122 = vld [vmem:[#allocation5 + $0x178] sm:$0xff]
    %v123 = vld [vmem:[#allocation5 + $0x180] sm:$0xff]
    %v124 = vld [vmem:[#allocation5 + $0x188] sm:$0xff]
    %v125 = vld [vmem:[#allocation5 + $0x190] sm:$0xff]
    %v126 = vld [vmem:[#allocation5 + $0x198] sm:$0xff]
    %v127 = vld [vmem:[#allocation5 + $0x1a0] sm:$0xff]
    %v128 = vld [vmem:[#allocation5 + $0x1a8] sm:$0xff]
    %v129 = vld [vmem:[#allocation5 + $0x1b0] sm:$0xff]
    %v130 = vld [vmem:[#allocation5 + $0x1b8] sm:$0xff]
    %v131 = vld [vmem:[#allocation5 + $0x1c0] sm:$0xff]
    %v132 = vld [vmem:[#allocation5 + $0x1c8] sm:$0xff]
    %v133 = vld [vmem:[#allocation5 + $0x1d0] sm:$0xff]
    %v134 = vld [vmem:[#allocation5 + $0x1d8] sm:$0xff]
    %v135 = vld [vmem:[#allocation5 + $0x1e0] sm:$0xff]
    %v136 = vld [vmem:[#allocation5 + $0x1e8] sm:$0xff]
    %v137 = vld [vmem:[#allocation5 + $0x1f0] sm:$0xff]
    %v138 = vld [vmem:[#allocation5 + $0x1f8] sm:$0xff]
    %v139 = vld [vmem:[#allocation5 + $0x200] sm:$0xff]
    %v140 = vld [vmem:[#allocation5 + $0x208] sm:$0xff]
    %v141 = vld [vmem:[#allocation5 + $0x210] sm:$0xff]
    %v142 = vld [vmem:[#allocation5 + $0x218] sm:$0xff]
    %v143 = vld [vmem:[#allocation5 + $0x220] sm:$0xff]
    %v144 = vld [vmem:[#allocation5 + $0x228] sm:$0xff]
    %v145 = vld [vmem:[#allocation5 + $0x230] sm:$0xff]
    %v146 = vld [vmem:[#allocation5 + $0x238] sm:$0xff]
    %v147 = vld [vmem:[#allocation5 + $0x240] sm:$0xff]
    %v148 = vld [vmem:[#allocation5 + $0x248] sm:$0xff]
    %v149 = vld [vmem:[#allocation5 + $0x250] sm:$0xff]
    %v150 = vld [vmem:[#allocation5 + $0x258] sm:$0xff]
    %v151 = vld [vmem:[#allocation5 + $0x260] sm:$0xff]
    %v152 = vld [vmem:[#allocation5 + $0x268] sm:$0xff]
    %v153 = vld [vmem:[#allocation5 + $0x270] sm:$0xff]
    %v154 = vld [vmem:[#allocation5 + $0x278] sm:$0xff]
    %v155 = vld [vmem:[#allocation5 + $0x280] sm:$0xff]
    %v156 = vld [vmem:[#allocation5 + $0x288] sm:$0xff]
    %v157 = vld [vmem:[#allocation5 + $0x290] sm:$0xff]
    %v158 = vld [vmem:[#allocation5 + $0x298] sm:$0xff]
    %v159 = vld [vmem:[#allocation5 + $0x2a0] sm:$0xff]
    %v160 = vld [vmem:[#allocation5 + $0x2a8] sm:$0xff]
    %v161 = vld [vmem:[#allocation5 + $0x2b0] sm:$0xff]
    %v162 = vld [vmem:[#allocation5 + $0x2b8] sm:$0xff]
    %v163 = vld [vmem:[#allocation5 + $0x2c0] sm:$0xff]
    %v164 = vld [vmem:[#allocation5 + $0x2c8] sm:$0xff]
    %v165 = vld [vmem:[#allocation5 + $0x2d0] sm:$0xff]
    %v166 = vld [vmem:[#allocation5 + $0x2d8] sm:$0xff]
    %v167 = vld [vmem:[#allocation5 + $0x2e0] sm:$0xff]
    %v168 = vld [vmem:[#allocation5 + $0x2e8] sm:$0xff]
    %v169 = vld [vmem:[#allocation5 + $0x2f0] sm:$0xff]
    %v170 = vld [vmem:[#allocation5 + $0x2f8] sm:$0xff]
    %v171 = vld [vmem:[#allocation5 + $0x300] sm:$0xff]
    %v172 = vld [vmem:[#allocation5 + $0x308] sm:$0xff]
    %v173 = vpack.c.bf16 %v76, %v75
    %v174 = vpack.c.bf16 %v78, %v77
    %v175 = vpack.c.bf16 %v80, %v79
    %v176 = vpack.c.bf16 %v82, %v81
    %v177 = vpack.c.bf16 %v84, %v83
    %v178 = vpack.c.bf16 %v86, %v85
    %v179 = vpack.c.bf16 %v88, %v87
    %v180 = vpack.c.bf16 %v90, %v89
    %v181 = vpack.c.bf16 %v92, %v91
    %v182 = vpack.c.bf16 %v94, %v93
    %v183 = vpack.c.bf16 %v96, %v95
    %v184 = vpack.c.bf16 %v98, %v97
    %v185 = vpack.c.bf16 %v100, %v99
    %v186 = vpack.c.bf16 %v102, %v101
    %v187 = vpack.c.bf16 %v104, %v103
    %v188 = vpack.c.bf16 %v106, %v105
    %v189 = vpack.c.bf16 %v108, %v107
    %v190 = vpack.c.bf16 %v110, %v109
    %v191 = vpack.c.bf16 %v112, %v111
    %v192 = vpack.c.bf16 %v114, %v113
    %v193 = vpack.c.bf16 %v116, %v115
    %v194 = vpack.c.bf16 %v118, %v117
    %v195 = vpack.c.bf16 %v120, %v119
    %v196 = vpack.c.bf16 %v122, %v121
    %v197 = vpack.c.bf16 %v124, %v123
    %v198 = vpack.c.bf16 %v126, %v125
    %v199 = vpack.c.bf16 %v128, %v127
    %v200 = vpack.c.bf16 %v130, %v129
    %v201 = vpack.c.bf16 %v132, %v131
    %v202 = vpack.c.bf16 %v134, %v133
    %v203 = vpack.c.bf16 %v136, %v135
    %v204 = vpack.c.bf16 %v138, %v137
    %v205 = vpack.c.bf16 %v140, %v139
    %v206 = vpack.c.bf16 %v142, %v141
    %v207 = vpack.c.bf16 %v144, %v143
    %v208 = vpack.c.bf16 %v146, %v145
    %v209 = vpack.c.bf16 %v148, %v147
    %v210 = vpack.c.bf16 %v150, %v149
    %v211 = vpack.c.bf16 %v152, %v151
    %v212 = vpack.c.bf16 %v154, %v153
    %v213 = vpack.c.bf16 %v156, %v155
    %v214 = vpack.c.bf16 %v158, %v157
    %v215 = vpack.c.bf16 %v160, %v159
    %v216 = vpack.c.bf16 %v162, %v161
    %v217 = vpack.c.bf16 %v164, %v163
    %v218 = vpack.c.bf16 %v166, %v165
    %v219 = vpack.c.bf16 %v168, %v167
    %v220 = vpack.c.bf16 %v170, %v169
    %v221 = vpack.c.bf16 %v172, %v171
    %v222 = vld [vmem:[%s2] sm:$0x3]
    %v223 = vld [vmem:[#allocation7] sm:$0xff]
    %v224 = vld [vmem:[#allocation7 + $0x8] sm:$0xff]
    %v225 = vld [vmem:[#allocation7 + $0x10] sm:$0xff]
    %v226 = vld [vmem:[#allocation7 + $0x18] sm:$0xff]
    %v227 = vld [vmem:[#allocation7 + $0x20] sm:$0xff]
    %v228 = vld [vmem:[#allocation7 + $0x28] sm:$0xff]
    %v229 = vld [vmem:[#allocation7 + $0x30] sm:$0xff]
    %v230 = vld [vmem:[#allocation7 + $0x38] sm:$0xff]
    %v231 = vld [vmem:[#allocation7 + $0x40] sm:$0xff]
    %v232 = vld [vmem:[#allocation7 + $0x48] sm:$0xff]
    %v233 = vld [vmem:[#allocation7 + $0x50] sm:$0xff]
    %v234 = vld [vmem:[#allocation7 + $0x58] sm:$0xff]
    %v235 = vld [vmem:[#allocation7 + $0x60] sm:$0xff]
    %v236 = vld [vmem:[#allocation7 + $0x68] sm:$0xff]
    %v237 = vld [vmem:[#allocation7 + $0x70] sm:$0xff]
    %v238 = vld [vmem:[#allocation7 + $0x78] sm:$0xff]
    %v239 = vld [vmem:[%s4] sm:$0x1]
    %vm240 = vcmask 130048
    %v242 = vsel %vm240, %v74, 0
    %244 = vmatprep.subr.bf16.mxu0 0
    %245 = vmatpush1.bf16.msra.mxu0 %v173
    %246 = vmatprep.subr.bf16.mxu0 0
    %247 = vmatpush1.bf16.msra.mxu0 %v174
    %248 = vmatprep.subr.bf16.mxu0 0
    %249 = vmatpush1.bf16.msra.mxu0 %v175
    %250 = vmatprep.subr.bf16.mxu0 0
    %251 = vmatpush1.bf16.msra.mxu0 %v176
    %252 = vmatprep.subr.bf16.mxu0 0
    %253 = vmatpush1.bf16.msra.mxu0 %v177
    %254 = vmatprep.subr.bf16.mxu0 0
    %255 = vmatpush1.bf16.msra.mxu0 %v178
    %256 = vmatprep.subr.bf16.mxu0 0
    %257 = vmatpush1.bf16.msra.mxu0 %v179
    %258 = vmatprep.subr.bf16.mxu0 0
    %259 = vmatpush1.bf16.msra.mxu0 %v180
    %260 = vmatprep.subr.bf16.mxu0 0
    %261 = vmatpush1.bf16.msra.mxu0 %v181
    %262 = vmatprep.subr.bf16.mxu0 0
    %263 = vmatpush1.bf16.msra.mxu0 %v182
    %264 = vmatprep.subr.bf16.mxu0 0
    %265 = vmatpush1.bf16.msra.mxu0 %v183
    %266 = vmatprep.subr.bf16.mxu0 0
    %267 = vmatpush1.bf16.msra.mxu0 %v184
    %268 = vmatprep.subr.bf16.mxu0 0
    %269 = vmatpush1.bf16.msra.mxu0 %v185
    %270 = vmatprep.subr.bf16.mxu0 0
    %271 = vmatpush1.bf16.msra.mxu0 %v186
    %272 = vmatprep.subr.bf16.mxu0 0
    %273 = vmatpush1.bf16.msra.mxu0 %v187
    %274 = vmatprep.subr.bf16.mxu0 0
    %275 = vmatpush1.bf16.msra.mxu0 %v188
    %276 = vmatprep.mubr.bf16.mxu0 %v69
    %277 = vmatmul.mubr.bf16.gmra.mrb[0].mxu0 %v68
    %v278 = vpop.f32.mrb[0].mxu0
    %v279 = vadd.f32 0.0, %v278
    %v280 = vpop.f32.mrb[0].mxu0
    %v281 = vpop.f32.mrb[0].mxu0
    %v282 = vpop.f32.mrb[0].mxu0
    %283 = vdwg.mxu0
    %284 = vmatprep.subr.bf16.mxu0 0
    %285 = vmatpush1.bf16.msra.mxu0 %v189
    %286 = vmatprep.subr.bf16.mxu0 0
    %287 = vmatpush1.bf16.msra.mxu0 %v190
    %288 = vmatprep.subr.bf16.mxu0 0
    %289 = vmatpush1.bf16.msra.mxu0 %v191
    %290 = vmatprep.subr.bf16.mxu0 0
    %291 = vmatpush1.bf16.msra.mxu0 %v192
    %292 = vmatprep.subr.bf16.mxu0 0
    %293 = vmatpush1.bf16.msra.mxu0 %v193
    %294 = vmatprep.subr.bf16.mxu0 0
    %295 = vmatpush1.bf16.msra.mxu0 %v194
    %296 = vmatprep.subr.bf16.mxu0 0
    %297 = vmatpush1.bf16.msra.mxu0 %v195
    %298 = vmatprep.subr.bf16.mxu0 0
    %299 = vmatpush1.bf16.msra.mxu0 %v196
    %300 = vmatprep.subr.bf16.mxu0 0
    %301 = vmatpush1.bf16.msra.mxu0 %v197
    %302 = vmatprep.subr.bf16.mxu0 0
    %303 = vmatpush1.bf16.msra.mxu0 %v198
    %304 = vmatprep.subr.bf16.mxu0 0
    %305 = vmatpush1.bf16.msra.mxu0 %v199
    %306 = vmatprep.subr.bf16.mxu0 0
    %307 = vmatpush1.bf16.msra.mxu0 %v200
    %308 = vmatprep.subr.bf16.mxu0 0
    %309 = vmatpush1.bf16.msra.mxu0 %v201
    %310 = vmatprep.subr.bf16.mxu0 0
    %311 = vmatpush1.bf16.msra.mxu0 %v202
    %312 = vmatprep.subr.bf16.mxu0 0
    %313 = vmatpush1.bf16.msra.mxu0 %v203
    %314 = vmatprep.subr.bf16.mxu0 0
    %315 = vmatpush1.bf16.msra.mxu0 %v204
    %316 = vmatprep.mubr.bf16.mxu0 %v71
    %317 = vmatmul.mubr.bf16.gmra.mrb[0].mxu0 %v70
    %v318 = vpop.f32.mrb[0].mxu0
    %v319 = vadd.f32 %v279, %v318
    %v320 = vpop.f32.mrb[0].mxu0
    %v321 = vpop.f32.mrb[0].mxu0
    %v322 = vpop.f32.mrb[0].mxu0
    %323 = vdwg.mxu0
    %324 = vmatprep.subr.bf16.mxu0 0
    %325 = vmatpush1.bf16.msra.mxu0 %v205
    %326 = vmatprep.subr.bf16.mxu0 0
    %327 = vmatpush1.bf16.msra.mxu0 %v206
    %328 = vmatprep.subr.bf16.mxu0 0
    %329 = vmatpush1.bf16.msra.mxu0 %v207
    %330 = vmatprep.subr.bf16.mxu0 0
    %331 = vmatpush1.bf16.msra.mxu0 %v208
    %332 = vmatprep.subr.bf16.mxu0 0
    %333 = vmatpush1.bf16.msra.mxu0 %v209
    %334 = vmatprep.subr.bf16.mxu0 0
    %335 = vmatpush1.bf16.msra.mxu0 %v210
    %336 = vmatprep.subr.bf16.mxu0 0
    %337 = vmatpush1.bf16.msra.mxu0 %v211
    %338 = vmatprep.subr.bf16.mxu0 0
    %339 = vmatpush1.bf16.msra.mxu0 %v212
    %340 = vmatprep.subr.bf16.mxu0 0
    %341 = vmatpush1.bf16.msra.mxu0 %v213
    %342 = vmatprep.subr.bf16.mxu0 0
    %343 = vmatpush1.bf16.msra.mxu0 %v214
    %344 = vmatprep.subr.bf16.mxu0 0
    %345 = vmatpush1.bf16.msra.mxu0 %v215
    %346 = vmatprep.subr.bf16.mxu0 0
    %347 = vmatpush1.bf16.msra.mxu0 %v216
    %348 = vmatprep.subr.bf16.mxu0 0
    %349 = vmatpush1.bf16.msra.mxu0 %v217
    %350 = vmatprep.subr.bf16.mxu0 0
    %351 = vmatpush1.bf16.msra.mxu0 %v218
    %352 = vmatprep.subr.bf16.mxu0 0
    %353 = vmatpush1.bf16.msra.mxu0 %v219
    %354 = vmatprep.subr.bf16.mxu0 0
    %355 = vmatpush1.bf16.msra.mxu0 %v220
    %356 = vmatprep.mubr.bf16.mxu0 %v73
    %357 = vmatmul.mubr.bf16.gmra.mrb[0].mxu0 %v72
    %v358 = vpop.f32.mrb[0].mxu0
    %v359 = vadd.f32 %v319, %v358
    %v360 = vpop.f32.mrb[0].mxu0
    %v361 = vpop.f32.mrb[0].mxu0
    %v362 = vpop.f32.mrb[0].mxu0
    %363 = vdwg.mxu0
    %364 = vmatprep.subr.bf16.mxu0 0
    %365 = vmatpush1.bf16.msra.mxu0 %v221
    %366 = vmatprep.subr.bf16.mxu0 0
    %367 = vmatpush1.bf16.msra.mxu0 0
    %368 = vmatprep.subr.bf16.mxu0 0
    %369 = vmatpush1.bf16.msra.mxu0 0
    %370 = vmatprep.subr.bf16.mxu0 0
    %371 = vmatpush1.bf16.msra.mxu0 0
    %372 = vmatprep.subr.bf16.mxu0 0
    %373 = vmatpush1.bf16.msra.mxu0 0
    %374 = vmatprep.subr.bf16.mxu0 0
    %375 = vmatpush1.bf16.msra.mxu0 0
    %376 = vmatprep.subr.bf16.mxu0 0
    %377 = vmatpush1.bf16.msra.mxu0 0
    %378 = vmatprep.subr.bf16.mxu0 0
    %379 = vmatpush1.bf16.msra.mxu0 0
    %380 = vmatprep.subr.bf16.mxu0 0
    %381 = vmatpush1.bf16.msra.mxu0 0
    %382 = vmatprep.subr.bf16.mxu0 0
    %383 = vmatpush1.bf16.msra.mxu0 0
    %384 = vmatprep.subr.bf16.mxu0 0
    %385 = vmatpush1.bf16.msra.mxu0 0
    %386 = vmatprep.subr.bf16.mxu0 0
    %387 = vmatpush1.bf16.msra.mxu0 0
    %388 = vmatprep.subr.bf16.mxu0 0
    %389 = vmatpush1.bf16.msra.mxu0 0
    %390 = vmatprep.subr.bf16.mxu0 0
    %391 = vmatpush1.bf16.msra.mxu0 0
    %392 = vmatprep.subr.bf16.mxu0 0
    %393 = vmatpush1.bf16.msra.mxu0 0
    %394 = vmatprep.subr.bf16.mxu0 0
    %395 = vmatpush1.bf16.msra.mxu0 0
    %396 = vmatprep.mubr.bf16.mxu0 0
    %397 = vmatmul.mubr.bf16.gmra.mrb[0].mxu0 %v242
    %v398 = vpop.f32.mrb[0].mxu0
    %v399 = vadd.f32 %v359, %v398
    %v400 = vpop.f32.mrb[0].mxu0
    %v401 = vpop.f32.mrb[0].mxu0
    %v402 = vpop.f32.mrb[0].mxu0
    %403 = vdwg.mxu0
    %v404 = vlaneseq
    %v405 = vshrl.u32 %v404, 7
    %v406 = vsub.s32 1, %v405
    %v407 = vrot.slane %v222, %v406
    %v408 = vadd.f32 %v399, %v407
    %v409 = vmax.f32 %v408, 0.0
    %v411 = vlaneseq
    %v412 = vshrl.u32 %v411, 7
    %v413 = vsub.s32 0, %v412
    %v414 = vrot.slane %v239, %v413
    %416 = vmatprep.subr.mxu0 0.0
    %417 = vmatpush1.msra.mxu0 %v223
    %418 = vmatprep.subr.mxu0 0.0
    %419 = vmatpush1.msra.mxu0 %v224
    %420 = vmatprep.subr.mxu0 0.0
    %421 = vmatpush1.msra.mxu0 %v225
    %422 = vmatprep.subr.mxu0 0.0
    %423 = vmatpush1.msra.mxu0 %v226
    %424 = vmatprep.subr.mxu0 0.0
    %425 = vmatpush1.msra.mxu0 %v227
    %426 = vmatprep.subr.mxu0 0.0
    %427 = vmatpush1.msra.mxu0 %v228
    %428 = vmatprep.subr.mxu0 0.0
    %429 = vmatpush1.msra.mxu0 %v229
    %430 = vmatprep.subr.mxu0 0.0
    %431 = vmatpush1.msra.mxu0 %v230
    %432 = vmatprep.subr.mxu0 0.0
    %433 = vmatpush1.msra.mxu0 %v231
    %434 = vmatprep.subr.mxu0 0.0
    %435 = vmatpush1.msra.mxu0 %v232
    %436 = vmatprep.subr.mxu0 0.0
    %437 = vmatpush1.msra.mxu0 %v233
    %438 = vmatprep.subr.mxu0 0.0
    %439 = vmatpush1.msra.mxu0 %v234
    %440 = vmatprep.subr.mxu0 0.0
    %441 = vmatpush1.msra.mxu0 %v235
    %442 = vmatprep.subr.mxu0 0.0
    %443 = vmatpush1.msra.mxu0 %v236
    %444 = vmatprep.subr.mxu0 0.0
    %445 = vmatpush1.msra.mxu0 %v237
    %446 = vmatprep.subr.mxu0 0.0
    %447 = vmatpush1.msra.mxu0 %v238
    %448 = vmatprep.subr.mxu0 0.0
    %449 = vmatpush1.msra.mxu0 0.0
    %450 = vmatprep.subr.mxu0 0.0
    %451 = vmatpush1.msra.mxu0 0.0
    %452 = vmatprep.subr.mxu0 0.0
    %453 = vmatpush1.msra.mxu0 0.0
    %454 = vmatprep.subr.mxu0 0.0
    %455 = vmatpush1.msra.mxu0 0.0
    %456 = vmatprep.subr.mxu0 0.0
    %457 = vmatpush1.msra.mxu0 0.0
    %458 = vmatprep.subr.mxu0 0.0
    %459 = vmatpush1.msra.mxu0 0.0
    %460 = vmatprep.subr.mxu0 0.0
    %461 = vmatpush1.msra.mxu0 0.0
    %462 = vmatprep.subr.mxu0 0.0
    %463 = vmatpush1.msra.mxu0 0.0
    %464 = vmatprep.subr.mxu0 0.0
    %465 = vmatpush1.msra.mxu0 0.0
    %466 = vmatprep.subr.mxu0 0.0
    %467 = vmatpush1.msra.mxu0 0.0
    %468 = vmatprep.subr.mxu0 0.0
    %469 = vmatpush1.msra.mxu0 0.0
    %470 = vmatprep.subr.mxu0 0.0
    %471 = vmatpush1.msra.mxu0 0.0
    %472 = vmatprep.subr.mxu0 0.0
    %473 = vmatpush1.msra.mxu0 0.0
    %474 = vmatprep.subr.mxu0 0.0
    %475 = vmatpush1.msra.mxu0 0.0
    %476 = vmatprep.subr.mxu0 0.0
    %477 = vmatpush1.msra.mxu0 0.0
    %478 = vmatprep.subr.mxu0 0.0
    %479 = vmatpush1.msra.mxu0 0.0
    %480 = vmatprep.mubr.f32.mxu0 0.0
    %481 = vmatmul.mubr.f32.gmra.mrb[0].mxu0 %v409
    %v482 = vpop.f32.mrb[0].mxu0
    %v483 = vadd.f32 %v414, %v482
    %v484 = vpop.f32.mrb[0].mxu0
    %485 = vdwg.mxu0
    %v486 = vlaneseq
    %v487 = vand.u32 %v486, 127
    %vm488 = vcmp.lt.s32.totalorder %v487, 10
    %v489 = vsel %vm488, %v483, -1e+30
    %490 = vmax.xlane.f32.xlu0 %v489
    %v491 = vpop.xlane.xlu0 %490
    %v492 = vsub.f32 %v489, %v491
    %v493 = vmul.f32 %v492, 1.442695
    %v494 = vpow.pop %v493
    %v495 = vsel %vm488, %v494, 0.0
    %496 = vadd.xlane.f32.xlu0 %v495
    %v497 = vpop.xlane.xlu0 %496
    %v498 = vrcp.pop %v497
    %v499 = vmul.f32 %v495, %v498
    %vm500 = vcmp.eq.f32.partialorder %v499, 0.0
    %v501 = vsel %vm500, 1.0, %v499
    %v502 = vlog2.pop %v501
    %v503 = vmul.f32 %v502, 0.6931472
    %v504 = vmul.f32 %v501, %v503
    %505 = vadd.xlane.f32.xlu0 %v504
    %v506 = vpop.xlane.xlu0 %505
    %v507 = vmul.f32 %v499, %v483
    %508 = vadd.xlane.f32.xlu0 %v507
    %v509 = vpop.xlane.xlu0 %508
    %v510 = vsub.f32 %v506, %v509
    %v511 = vmul.f32 %v409, 0.5
    %v512 = vsub.f32 %v511, %v399
    %v513 = vlaneseq
    %v514 = vshrl.u32 %v513, 7
    %v515 = vsub.s32 0, %v514
    %v516 = vrot.slane %v222, %v515
    %v517 = vsub.f32 %v512, %v516
    %v518 = vmul.f32 %v409, %v517
    %519 = vadd.xlane.f32.xlu0 %v518
    %v520 = vpop.xlane.xlu0 %519
    %v521 = vadd.f32 %v510, %v520
    %v522 = vsel %vm488, %v483, 0.0
    %vm523 = vcmp.eq.s32.totalorder %v487, 10
    %v524 = vsel %vm523, %v521, %v522
    %vm525 = vcmp.eq.s32.totalorder %v487, 11
    %v526 = vsel %vm525, %v506, %v524
    %527 = vst [vmem:[#allocation8] sm:$0xff] %v526
    // Predicated region
    $region34: #{tpu_custom_call.1} parent=1 // pred_check
      _
    $region35: #{tpu_custom_call.1} parent=1 // pred_check_branch
      %529 = sbr.rel (0) target = $region37
    $region36: #{tpu_custom_call.1} parent=1 // pred_region
      %s531 = ssub.s32 128, 128
      %532 = vsyncadd [#allocation4], %s531
      %s534 = sshll.u32 [#allocation8], 4
      %s535 = int_to_ptr.vmem [resolvable:$true] %s534
      %537 = dma.vmem_to_hbm [thread:$0]  %s535, 128, %s5, [#allocation4]
    $region37: #{tpu_custom_call.1} parent=1 // pred_fallthru
      _
    // Predicated region
    $region38: #{tpu_custom_call.1} parent=1 // pred_check
      _
    $region39: #{tpu_custom_call.1} parent=1 // pred_check_branch
      %539 = sbr.rel (0) target = $region41
    $region40: #{tpu_custom_call.1} parent=1 // pred_region
      %540 = dma.done [#allocation4], 128
    $region41: #{tpu_custom_call.1} parent=1 // pred_fallthru
      _
    %541 = vsyncpa [#allocation3], 1
    %542 = vsyncpa [#allocation6], 1
    %543 = vsyncpa [#allocation4], 1

</llo_original>
